<compile_context>
chip_gen: v7x
topology: tpu7x:2x2x1
jax: 0.10.0
libtpu: 0.0.40
codegen_flags: <defaults>
</compile_context>

<pallas_src>
import math

import jax
import jax.numpy as jnp
from jax.experimental import pallas as pl
from jax.experimental.pallas import tpu as pltpu


def _gelu_tanh(x):
    # Same tanh approximation as torch.nn.functional.gelu(approximate='tanh')
    # and jax.nn.gelu(approximate=True).
    c = math.sqrt(2.0 / math.pi)
    return 0.5 * x * (1.0 + jnp.tanh(c * (x + 0.044715 * x * x * x)))


def _round_up(x, m):
    return ((x + m - 1) // m) * m


ROW_ALIGN = 256  # MXU tile (2x256^2 on v6e/v7x); also a multiple of 128 for v5e.


def mlp_block_kernel(x_ref, wg_ref, wl_ref, bg_ref, bl_ref, wd_ref, bd_ref,
                     o_ref, acc_ref):
    """Fused gated-MLP step for one (row-tile i, E-tile k) grid point."""
    k = pl.program_id(1)

    @pl.when(k == 0)
    def _init():
        acc_ref[...] = jnp.zeros_like(acc_ref)

    # Cast the activation tile in-kernel (VPU); no-op when dtypes match.
    x = x_ref[...].astype(wg_ref.dtype)

    # Two independent up-projections for this E-tile; f32 accumulate on MXU.
    gate = jnp.dot(x, wg_ref[...], preferred_element_type=jnp.float32) + bg_ref[...]
    lin = jnp.dot(x, wl_ref[...], preferred_element_type=jnp.float32) + bl_ref[...]

    # GELU gating in f32, cast immediately for the down-projection MXU pass.
    act = (_gelu_tanh(gate) * lin).astype(wd_ref.dtype)

    # Down projection E-tile -> accumulate into the [tm, D] f32 accumulator.
    acc_ref[...] += jnp.dot(act, wd_ref[...], preferred_element_type=jnp.float32)

    @pl.when(k == pl.num_programs(1) - 1)
    def _finalize():
        # b_down added exactly once; single lane-dense store per row tile.
        o_ref[...] = (acc_ref[...] + bd_ref[...]).astype(o_ref.dtype)


def _vmem_capacity_bytes():
    try:
        info = pltpu.get_tpu_info()
        cap = getattr(info, "vmem_capacity_bytes", None)
        if cap:
            return int(cap)
    except Exception:
        pass
    return 64 << 20  # conservative (v7x per-TC) -> safe on every generation


def _pick_row_tile(T, tm_pref):
    """MXU-aligned row tile; guarantees >=2 row tiles for megacore when T allows."""
    if T <= 2 * ROW_ALIGN:
        # Small / decode-like T: one row tile, kept a multiple of 16 so bf16
        # [16,128] sublane packing and (8,*) block constraints hold.
        # TODO(synk): for tiny-T decode shapes, shard work across cores instead.
        return _round_up(max(T, 1), 16)
    half = ((T + 1) // 2 // ROW_ALIGN) * ROW_ALIGN
    return max(ROW_ALIGN, min(tm_pref, half))


def prepare_mlp_weights(w_up, b_up, w_down, b_down, *,
                        compute_dtype=jnp.bfloat16, te_pref=None):
    """Once-per-layer weight preparation (casts, transpose, E padding).

    w_up: [2, D, E]   (ffw_up.w)
    b_up: [2, 1, 1, E] or [2, 1, E] or [2, E]   (ffw_up.b)
    w_down: [D, E]    (ffw_down.weight, torch Linear layout)
    b_down: [D]       (ffw_down.bias)
    """
    _, D, E = w_up.shape
    if te_pref is None:
        te_pref = 512
    te = min(te_pref, _round_up(E, 128))
    te = max(128, (te // 128) * 128)          # lane-aligned E tile
    Ep = _round_up(E, te)
    pad_e = Ep - E

    b2 = b_up.reshape(2, E)
    wg = jnp.pad(w_up[0], ((0, 0), (0, pad_e))).astype(compute_dtype)   # [D, Ep]
    wl = jnp.pad(w_up[1], ((0, 0), (0, pad_e))).astype(compute_dtype)   # [D, Ep]
    bg = jnp.pad(b2[0], (0, pad_e)).reshape(1, Ep).astype(jnp.float32)
    bl = jnp.pad(b2[1], (0, pad_e)).reshape(1, Ep).astype(jnp.float32)
    # Zero-padded extra E rows contribute nothing to the down projection.
    wd = jnp.pad(w_down.T, ((0, pad_e), (0, 0))).astype(compute_dtype)  # [Ep, D]
    bd = b_down.reshape(1, D).astype(jnp.float32)

    return {"w_gate": wg, "w_linear": wl, "b_gate": bg, "b_linear": bl,
            "w_down_t": wd, "b_down": bd, "e_tile": int(te)}


def mlp_block(x, params, *, tm_pref=None):
    """x: [B, S, D]; params from prepare_mlp_weights."""
    B, S, D = x.shape
    T = B * S
    wg, wl = params["w_gate"], params["w_linear"]
    bg, bl = params["b_gate"], params["b_linear"]
    wd, bd = params["w_down_t"], params["b_down"]
    te = params["e_tile"]
    Ep = wg.shape[1]
    kE = Ep // te

    compute_dtype = wg.dtype
    out_dtype = x.dtype
    xbytes = jnp.dtype(x.dtype).itemsize
    cbytes = jnp.dtype(compute_dtype).itemsize
    obytes = jnp.dtype(out_dtype).itemsize

    vmem_cap = _vmem_capacity_bytes()
    if tm_pref is None:
        # ~512 rows on 64 MiB/TC (v7x), ~1024 rows on 128 MiB (v5e/v6e).
        tm_pref = 512 if vmem_cap <= (64 << 20) else 1024
    tm = _pick_row_tile(T, tm_pref)
    Tp = _round_up(T, tm)
    n_row = Tp // tm

    # Pad rows only (no per-call weight work).
    x2 = x.reshape(T, D)
    if Tp > T:
        x2 = jnp.pad(x2, ((0, Tp - T), (0, 0)))

    # Double-buffered tiles + f32 accumulator + in-kernel temporaries.
    per_step = (tm * D * xbytes            # x tile
                + 2 * D * te * cbytes      # gate + linear weight tiles
                + 2 * te * 4               # two bias tiles
                + te * D * cbytes          # w_down tile
                + D * 4                    # b_down
                + tm * D * obytes)         # out tile
    temps = 2 * tm * te * 4 + tm * te * cbytes + tm * D * cbytes
    vmem_need = 2 * per_step + tm * D * 4 + temps
    vmem_limit = int(min(max(int(vmem_need * 1.3), 32 << 20), int(vmem_cap * 0.85)))

    cost = pl.CostEstimate(
        flops=6 * Tp * D * Ep,               # 2*T*D*2E (up) + 2*T*E*D (down)
        transcendentals=Tp * Ep,             # tanh per gate element
        bytes_accessed=(Tp * D * (xbytes + obytes)
                        + n_row * 3 * D * Ep * cbytes     # weights re-read per row tile
                        + n_row * (2 * Ep + D) * 4),
    )

    out = pl.pallas_call(
        mlp_block_kernel,
        out_shape=jax.ShapeDtypeStruct((Tp, D), out_dtype),
        grid_spec=pltpu.PrefetchScalarGridSpec(
            num_scalar_prefetch=0,
            grid=(n_row, kE),
            in_specs=[
                pl.BlockSpec((tm, D), lambda i, k: (i, 0)),    # x tile
                pl.BlockSpec((D, te), lambda i, k: (0, k)),    # w_up gate tile
                pl.BlockSpec((D, te), lambda i, k: (0, k)),    # w_up linear tile
                pl.BlockSpec((1, te), lambda i, k: (0, k)),    # b_up gate tile
                pl.BlockSpec((1, te), lambda i, k: (0, k)),    # b_up linear tile
                pl.BlockSpec((te, D), lambda i, k: (k, 0)),    # w_down tile
                pl.BlockSpec((1, D), lambda i, k: (0, 0)),     # b_down
                # TODO(synk): on v5e decode shapes add pipeline_mode=pl.Buffered(3)
                # to the weight specs to hide the exposed weight DMA.
            ],
            out_specs=pl.BlockSpec((tm, D), lambda i, k: (i, 0)),  # lane-dense D
            scratch_shapes=[pltpu.VMEM((tm, D), jnp.float32)],     # accumulator
        ),
        compiler_params=pltpu.CompilerParams(
            dimension_semantics=("parallel", "arbitrary"),
            vmem_limit_bytes=vmem_limit,
        ),
        cost_estimate=cost,
    )(x2, wg, wl, bg, bl, wd, bd)

    return out[:T].reshape(B, S, D)


def reference(x, w_up, b_up, w_down, b_down):
    """Pure-JAX reference in module parameter layout."""
    up = jnp.einsum('btd,cde->cbte', x, w_up) + b_up.reshape(2, 1, 1, -1)
    act = _gelu_tanh(up[0]) * up[1]
    return jnp.einsum('bte,de->btd', act, w_down) + b_down


if __name__ == "__main__":
    key = jax.random.PRNGKey(0)
    # Two configs: aligned shapes, and non-divisible T / E to exercise padding.
    configs = [(2, 16, 128, 256), (2, 13, 128, 200)]
    for (batch, seq, width, expanded) in configs:
        key, kx, kwu, kbu, kwd = jax.random.split(key, 5)
        x = jax.random.normal(kx, (batch, seq, width), dtype=jnp.float32)

        # Parameter shapes mirroring the module:
        #   ffw_up.w: (2, width, expanded); ffw_up.b: (2, 1, 1, expanded)
        #   ffw_down: nn.Linear(expanded, width) -> weight (width, expanded), bias (width,)
        w_up = jax.random.normal(kwu, (2, width, expanded), jnp.float32) / math.sqrt(width)
        b_up = 0.02 * jax.random.normal(kbu, (2, 1, 1, expanded), jnp.float32)
        final_w_init_variance_scale = 1.0
        w_down = jax.random.normal(kwd, (width, expanded), jnp.float32) * math.sqrt(
            final_w_init_variance_scale / expanded)
        b_down = jnp.zeros((width,), jnp.float32)

        ref = reference(x, w_up, b_up, w_down, b_down)

        # 1) f32 compute path (tight check); te_pref=128 -> real E-reduction (kE=2).
        p32 = prepare_mlp_weights(w_up, b_up, w_down, b_down,
                                  compute_dtype=jnp.float32, te_pref=128)
        out32 = mlp_block(x, p32)
        jax.block_until_ready(out32)
        assert out32.shape == (batch, seq, width)
        assert jnp.allclose(out32, ref, atol=1e-4, rtol=1e-4), "f32 path mismatch"

        # 2) default bf16-MXU path (bf16 matmul inputs, f32 accumulate): loose check.
        pbf = prepare_mlp_weights(w_up, b_up, w_down, b_down, te_pref=128)
        outbf = mlp_block(x, pbf)
        jax.block_until_ready(outbf)
        assert outbf.shape == (batch, seq, width)
        assert jnp.allclose(outbf, ref, atol=1e-1, rtol=1e-1), "bf16 path mismatch"

    print("KERNEL_OK")
</pallas_src>

<mosaic_0001>
module attributes {stable_mosaic.version = 11 : i64} {
  func.func @mlp_block_kernel(%arg0: i32, %arg1: i32, %arg2: memref<32x128xf32, #tpu.memory_space<vmem>>, %arg3: memref<128x128xf32, #tpu.memory_space<vmem>>, %arg4: memref<128x128xf32, #tpu.memory_space<vmem>>, %arg5: memref<1x128xf32, #tpu.memory_space<vmem>>, %arg6: memref<1x128xf32, #tpu.memory_space<vmem>>, %arg7: memref<128x128xf32, #tpu.memory_space<vmem>>, %arg8: memref<1x128xf32, #tpu.memory_space<vmem>>, %arg9: memref<32x128xf32, #tpu.memory_space<vmem>>, %arg10: memref<32x128xf32, #tpu.memory_space<vmem>>) attributes {dimension_semantics = [#tpu.dimension_semantics<parallel>, #tpu.dimension_semantics<arbitrary>], iteration_bounds = array<i64: 1, 2>, scalar_prefetch = 0 : i64, scratch_operands = 1 : i64, tpu.core_type = #tpu.core_type<tc>, window_params = [{transform_indices = @transform_0, window_bounds = array<i64: 32, 128>}, {transform_indices = @transform_1, window_bounds = array<i64: 128, 128>}, {transform_indices = @transform_2, window_bounds = array<i64: 128, 128>}, {transform_indices = @transform_3, window_bounds = array<i64: 1, 128>}, {transform_indices = @transform_4, window_bounds = array<i64: 1, 128>}, {transform_indices = @transform_5, window_bounds = array<i64: 128, 128>}, {pipeline_mode = #tpu.pipeline_mode<synchronous>, transform_indices = @transform_6, window_bounds = array<i64: 1, 128>}, {transform_indices = @transform_7, window_bounds = array<i64: 32, 128>}]} {
    %c0_i32 = arith.constant 0 : i32
    %0 = arith.cmpi eq, %arg1, %c0_i32 : i32
    %1 = arith.extui %0 : i1 to i32
    %c0_i32_0 = arith.constant 0 : i32
    %2 = arith.cmpi ne, %1, %c0_i32_0 : i32
    scf.if %2 {
      %cst_23 = arith.constant 0.000000e+00 : f32
      %36 = vector.broadcast %cst_23 : f32 to vector<32x128xf32>
      %c0_24 = arith.constant 0 : index
      %c0_25 = arith.constant 0 : index
      %37 = vector.load %arg10[%c0_24, %c0_25] : memref<32x128xf32, #tpu.memory_space<vmem>>, vector<32x128xf32>
      tpu.vector_store %arg10[%c0_24, %c0_25], %36 {strides = array<i32>} : memref<32x128xf32, #tpu.memory_space<vmem>>, vector<32x128xf32>,
    } else {
    }
    %c0 = arith.constant 0 : index
    %c0_1 = arith.constant 0 : index
    %3 = vector.load %arg2[%c0, %c0_1] : memref<32x128xf32, #tpu.memory_space<vmem>>, vector<32x128xf32>
    %c0_2 = arith.constant 0 : index
    %c0_3 = arith.constant 0 : index
    %4 = vector.load %arg3[%c0_2, %c0_3] : memref<128x128xf32, #tpu.memory_space<vmem>>, vector<128x128xf32>
    %cst = arith.constant dense<0.000000e+00> : vector<32x128xf32>
    %5 = tpu.matmul %3, %4, %cst {dimension_numbers = #tpu.dot_dimension_numbers<[1], [0], [0], [1], [0, 0, 1, 1], [], []>} : vector<32x128xf32>, vector<128x128xf32>, vector<32x128xf32> -> vector<32x128xf32>
    %c0_4 = arith.constant 0 : index
    %c0_5 = arith.constant 0 : index
    %6 = vector.load %arg5[%c0_4, %c0_5] : memref<1x128xf32, #tpu.memory_space<vmem>>, vector<1x128xf32>
    %7 = vector.broadcast %6 : vector<1x128xf32> to vector<32x128xf32>
    %8 = arith.addf %5, %7 : vector<32x128xf32>
    %c0_6 = arith.constant 0 : index
    %c0_7 = arith.constant 0 : index
    %9 = vector.load %arg4[%c0_6, %c0_7] : memref<128x128xf32, #tpu.memory_space<vmem>>, vector<128x128xf32>
    %cst_8 = arith.constant dense<0.000000e+00> : vector<32x128xf32>
    %10 = tpu.matmul %3, %9, %cst_8 {dimension_numbers = #tpu.dot_dimension_numbers<[1], [0], [0], [1], [0, 0, 1, 1], [], []>} : vector<32x128xf32>, vector<128x128xf32>, vector<32x128xf32> -> vector<32x128xf32>
    %c0_9 = arith.constant 0 : index
    %c0_10 = arith.constant 0 : index
    %11 = vector.load %arg6[%c0_9, %c0_10] : memref<1x128xf32, #tpu.memory_space<vmem>>, vector<1x128xf32>
    %12 = vector.broadcast %11 : vector<1x128xf32> to vector<32x128xf32>
    %13 = arith.addf %10, %12 : vector<32x128xf32>
    %cst_11 = arith.constant 5.000000e-01 : f32
    %14 = vector.broadcast %cst_11 : f32 to vector<32x128xf32>
    %15 = arith.mulf %14, %8 : vector<32x128xf32>
    %cst_12 = arith.constant 4.471500e-02 : f32
    %16 = vector.broadcast %cst_12 : f32 to vector<32x128xf32>
    %17 = arith.mulf %16, %8 : vector<32x128xf32>
    %18 = arith.mulf %17, %8 : vector<32x128xf32>
    %19 = arith.mulf %18, %8 : vector<32x128xf32>
    %20 = arith.addf %8, %19 : vector<32x128xf32>
    %cst_13 = arith.constant 0.797884583 : f32
    %21 = vector.broadcast %cst_13 : f32 to vector<32x128xf32>
    %22 = arith.mulf %21, %20 : vector<32x128xf32>
    %23 = math.tanh %22 : vector<32x128xf32>
    %cst_14 = arith.constant 1.000000e+00 : f32
    %24 = vector.broadcast %cst_14 : f32 to vector<32x128xf32>
    %25 = arith.addf %24, %23 : vector<32x128xf32>
    %26 = arith.mulf %15, %25 : vector<32x128xf32>
    %27 = arith.mulf %26, %13 : vector<32x128xf32>
    %c0_15 = arith.constant 0 : index
    %c0_16 = arith.constant 0 : index
    %28 = vector.load %arg10[%c0_15, %c0_16] : memref<32x128xf32, #tpu.memory_space<vmem>>, vector<32x128xf32>
    %c0_17 = arith.constant 0 : index
    %c0_18 = arith.constant 0 : index
    %29 = vector.load %arg7[%c0_17, %c0_18] : memref<128x128xf32, #tpu.memory_space<vmem>>, vector<128x128xf32>
    %cst_19 = arith.constant dense<0.000000e+00> : vector<32x128xf32>
    %30 = tpu.matmul %27, %29, %cst_19 {dimension_numbers = #tpu.dot_dimension_numbers<[1], [0], [0], [1], [0, 0, 1, 1], [], []>} : vector<32x128xf32>, vector<128x128xf32>, vector<32x128xf32> -> vector<32x128xf32>
    %31 = arith.addf %28, %30 : vector<32x128xf32>
    %c0_20 = arith.constant 0 : index
    %c0_21 = arith.constant 0 : index
    %32 = vector.load %arg10[%c0_20, %c0_21] : memref<32x128xf32, #tpu.memory_space<vmem>>, vector<32x128xf32>
    tpu.vector_store %arg10[%c0_20, %c0_21], %31 {strides = array<i32>} : memref<32x128xf32, #tpu.memory_space<vmem>>, vector<32x128xf32>,
    %c1_i32 = arith.constant 1 : i32
    %33 = arith.cmpi eq, %arg1, %c1_i32 : i32
    %34 = arith.extui %33 : i1 to i32
    %c0_i32_22 = arith.constant 0 : i32
    %35 = arith.cmpi ne, %34, %c0_i32_22 : i32
    scf.if %35 {
      %c0_23 = arith.constant 0 : index
      %c0_24 = arith.constant 0 : index
      %36 = vector.load %arg10[%c0_23, %c0_24] : memref<32x128xf32, #tpu.memory_space<vmem>>, vector<32x128xf32>
      %c0_25 = arith.constant 0 : index
      %c0_26 = arith.constant 0 : index
      %37 = vector.load %arg8[%c0_25, %c0_26] : memref<1x128xf32, #tpu.memory_space<vmem>>, vector<1x128xf32>
      %38 = vector.broadcast %37 : vector<1x128xf32> to vector<32x128xf32>
      %39 = arith.addf %36, %38 : vector<32x128xf32>
      %c0_27 = arith.constant 0 : index
      %c0_28 = arith.constant 0 : index
      %40 = vector.load %arg9[%c0_27, %c0_28] : memref<32x128xf32, #tpu.memory_space<vmem>>, vector<32x128xf32>
      tpu.vector_store %arg9[%c0_27, %c0_28], %39 {strides = array<i32>} : memref<32x128xf32, #tpu.memory_space<vmem>>, vector<32x128xf32>,
    } else {
    }
    return
  }
  func.func @transform_0(%arg0: i32, %arg1: i32) -> (i32, i32) {
    %c0_i32 = arith.constant 0 : i32
    %c0_i32_0 = arith.constant 0 : i32
    return %arg0, %c0_i32 : i32, i32
  }
  func.func @transform_1(%arg0: i32, %arg1: i32) -> (i32, i32) {
    %c0_i32 = arith.constant 0 : i32
    %c0_i32_0 = arith.constant 0 : i32
    return %c0_i32, %arg1 : i32, i32
  }
  func.func @transform_2(%arg0: i32, %arg1: i32) -> (i32, i32) {
    %c0_i32 = arith.constant 0 : i32
    %c0_i32_0 = arith.constant 0 : i32
    return %c0_i32, %arg1 : i32, i32
  }
  func.func @transform_3(%arg0: i32, %arg1: i32) -> (i32, i32) {
    %c0_i32 = arith.constant 0 : i32
    %c0_i32_0 = arith.constant 0 : i32
    return %c0_i32, %arg1 : i32, i32
  }
  func.func @transform_4(%arg0: i32, %arg1: i32) -> (i32, i32) {
    %c0_i32 = arith.constant 0 : i32
    %c0_i32_0 = arith.constant 0 : i32
    return %c0_i32, %arg1 : i32, i32
  }
  func.func @transform_5(%arg0: i32, %arg1: i32) -> (i32, i32) {
    %c0_i32 = arith.constant 0 : i32
    %c0_i32_0 = arith.constant 0 : i32
    return %arg1, %c0_i32 : i32, i32
  }
  func.func @transform_6(%arg0: i32, %arg1: i32) -> (i32, i32) {
    %c0_i32 = arith.constant 0 : i32
    %c0_i32_0 = arith.constant 0 : i32
    %c0_i32_1 = arith.constant 0 : i32
    return %c0_i32, %c0_i32_0 : i32, i32
  }
  func.func @transform_7(%arg0: i32, %arg1: i32) -> (i32, i32) {
    %c0_i32 = arith.constant 0 : i32
    %c0_i32_0 = arith.constant 0 : i32
    return %arg0, %c0_i32 : i32, i32
  }
}

</mosaic_0001>

<llo_original>
// kernel: tpu_custom_call.1
$region0: #{tpu_custom_call.1}
  #allocation0 [shape = 'u32[]', space=smem, size = 0x4, offset = 0x4, fixed_abs, tag = 'smem constant byte address 0x4 - core index']
  #allocation1 [shape = 'u32[144,128]{1,0:T(1,128)}', space=vmem, size = 0x12000, scoped, tag = 'internal scratch']
  #allocation2 [shape = 'f32[32,128]{1,0:T(8,128)}', space=vmem, size = 0x4000, scoped, tag = 'scratch operand']
  %s0 = inlined_call_operand.hbm [shape: f32[32,128], index: 0, kind: input, shape index: {}]
  %s1 = inlined_call_operand.hbm [shape: f32[128,256], index: 1, kind: input, shape index: {}]
  %s2 = inlined_call_operand.hbm [shape: f32[128,256], index: 2, kind: input, shape index: {}]
  %s3 = inlined_call_operand.vmem [shape: f32[1,256], index: 3, kind: input, shape index: {}]
  %s4 = inlined_call_operand.vmem [shape: f32[1,256], index: 4, kind: input, shape index: {}]
  %s5 = inlined_call_operand.hbm [shape: f32[256,128], index: 5, kind: input, shape index: {}]
  %s6 = inlined_call_operand.vmem [shape: f32[1,128], index: 6, kind: input, shape index: {}]
  %s7 = inlined_call_operand.hbm [shape: f32[32,128], index: 7, kind: output, shape index: {}]
  %s8 = sld [smem:[#allocation0]]
  $region85: #{tpu_custom_call.1} parent=0
    _
  %s10 = ssub.s32 1, %s8
  %s11 = scalar_select 0, %s10, %s8
  $region1: #{tpu_custom_call.1} parent=0
    #allocation3 [shape = 'u8[16384]{0}', space=vmem, size = 0x4000, scoped, tag = 'input window, operand 0, single buffered']
    #allocation4 [shape = 's32[2]{0}', space=sflag, size = 0x8, scoped, tag = 'scoped memory for tpu_custom_call.1']
    #allocation5 [shape = 's32[2]{0}', space=sflag, size = 0x8, scoped, tag = 'scoped memory for tpu_custom_call.1']
    #allocation6 [shape = 'u8[131072]{0}', space=vmem, size = 0x20000, scoped, tag = 'input window, operand 1']
    #allocation7 [shape = 's32[2]{0}', space=sflag, size = 0x8, scoped, tag = 'scoped memory for tpu_custom_call.1']
    #allocation8 [shape = 'u8[131072]{0}', space=vmem, size = 0x20000, scoped, tag = 'input window, operand 2']
    #allocation9 [shape = 'u8[131072]{0}', space=vmem, size = 0x20000, scoped, tag = 'input window, operand 5']
    #allocation10 [shape = 's32[2]{0}', space=sflag, size = 0x8, scoped, tag = 'scoped memory for tpu_custom_call.1']
    #allocation11 [shape = 'u8[16384]{0}', space=vmem, size = 0x4000, scoped, tag = 'output window, operand 0, single buffered']
    %12 = vsyncpa [#allocation4], 0
    %13 = vsyncpa [#allocation7], 0
    %s14 = scalar_lea.sflag [#allocation7], 1
    %15 = vsyncpa %s14, 0
    %16 = vsyncpa [#allocation10], 0
    %s17 = scalar_lea.sflag [#allocation10], 1
    %18 = vsyncpa %s17, 0
    %19 = vsyncpa [#allocation5], 0
    loop: start=0, step=1, limit=4
    $region2: #{tpu_custom_call.1} parent=1 // loop_pre_header
      _
    $region3: #{tpu_custom_call.1} parent=1 // loop_header
      %s21 = sphi 0, %s25
      %p22 = scmp.ge.s32.totalorder %s21, 4
      %s28 = sphi 0, %s40
      %s29 = sphi 0, %s36
      %s30 = sphi 0, %s28
      %s31 = sphi 0, %s29
      %s32 = sphi 0, %s30
      %s33 = sphi 0, %s31
      %s43 = sphi 0, %s45
      %s46 = sphi 0, %s43
      %s47 = sphi 0, %s46
      %s63 = sphi 0, %s47
      %s69 = sphi 0, %s71
      %s72 = sphi 0, %s69
      %s73 = sphi 0, %s72
      %s89 = sphi 0, %s73
      %s95 = sphi 0, %s97
      %s98 = sphi 0, %s95
      %s99 = sphi 0, %s98
      %s115 = sphi 0, %s99
      %s121 = sphi 0, %s123
      %s124 = sphi 0, %s121
      %s125 = sphi 0, %s124
      %s141 = sphi 0, %s125
      %s147 = sphi 0, %s149
      %s150 = sphi 0, %s147
      %s151 = sphi 0, %s150
      %s167 = sphi 0, %s151
      %s173 = sphi 0, %s175
      %s176 = sphi 0, %s173
      %s177 = sphi 0, %s176
      %s193 = sphi 0, %s177
      %s197 = sphi 0, %s197
      %s199 = sphi 0, %s197
      %s200 = sphi 0, %s199
      %s214 = sphi 0, %s200
      %s220 = sphi 0, %s222
      %s223 = sphi 0, %s220
      %s224 = sphi 0, %s223
      %s240 = sphi 0, %s224
    $region4: #{tpu_custom_call.1} parent=1 // loop_header_branch
      %24 = sbr.rel (%p22) target = $region8
    $region5: #{tpu_custom_call.1} parent=1 // loop_body
      %s26 = ssub.s32 %s21, 1
      %s27 = ssub.s32 %s21, 2
      %s34 = sadd.s32 1, %s29
      %p35 = scmp.ge.s32.totalorder %s34, 2
      %s36 = scalar_select %p35, 0, %s34
      %s37 = sadd.s32 1, %s28
      %s38 = scalar_select %p35, %s37, %s28
      %p39 = scmp.ge.s32.totalorder %s38, 1
      %s40 = scalar_select %p39, 0, %s38
      %s41 = ssub.s32 %s28, %s40
      %p42 = scmp.eq.s32.totalorder %s41, 0
      %s44 = sadd.s32 %s43, 1
      %s45 = scalar_select %p42, %s43, %s44
      %p48 = pneg %p42
      %p49 = scmp.eq.s32.totalorder %s21, 1
      %p50 = por %p48, %p49
      %p51 = scmp.ne.s32.totalorder %s43, %s46
      %p52 = scmp.eq.s32.totalorder %s21, 0
      %p53 = por %p51, %p52
      %p54 = scmp.ne.s32.totalorder %s43, %s46
      %p55 = scmp.eq.s32.totalorder %s26, 1
      %p56 = por %p54, %p55
      %p57 = scmp.ne.s32.totalorder %s46, %s47
      %p58 = scmp.eq.s32.totalorder %s26, 0
      %p59 = por %p57, %p58
      %p60 = scmp.ne.s32.totalorder %s46, %s47
      %p61 = scmp.eq.s32.totalorder %s27, 1
      %p62 = por %p60, %p61
      %p64 = scmp.ne.s32.totalorder %s47, %s63
      %p65 = scmp.eq.s32.totalorder %s27, 0
      %p66 = por %p64, %p65
      %s67 = ssub.s32 %s29, %s36
      %p68 = scmp.eq.s32.totalorder %s67, 0
      %s70 = sadd.s32 %s69, 1
      %s71 = scalar_select %p68, %s69, %s70
      %p74 = pneg %p68
      %p75 = scmp.eq.s32.totalorder %s21, 1
      %p76 = por %p74, %p75
      %p77 = scmp.ne.s32.totalorder %s69, %s72
      %p78 = scmp.eq.s32.totalorder %s21, 0
      %p79 = por %p77, %p78
      %p80 = scmp.ne.s32.totalorder %s69, %s72
      %p81 = scmp.eq.s32.totalorder %s26, 1
      %p82 = por %p80, %p81
      %p83 = scmp.ne.s32.totalorder %s72, %s73
      %p84 = scmp.eq.s32.totalorder %s26, 0
      %p85 = por %p83, %p84
      %p86 = scmp.ne.s32.totalorder %s72, %s73
      %p87 = scmp.eq.s32.totalorder %s27, 1
      %p88 = por %p86, %p87
      %p90 = scmp.ne.s32.totalorder %s73, %s89
      %p91 = scmp.eq.s32.totalorder %s27, 0
      %p92 = por %p90, %p91
      %s93 = ssub.s32 %s29, %s36
      %p94 = scmp.eq.s32.totalorder %s93, 0
      %s96 = sadd.s32 %s95, 1
      %s97 = scalar_select %p94, %s95, %s96
      %p100 = pneg %p94
      %p101 = scmp.eq.s32.totalorder %s21, 1
      %p102 = por %p100, %p101
      %p103 = scmp.ne.s32.totalorder %s95, %s98
      %p104 = scmp.eq.s32.totalorder %s21, 0
      %p105 = por %p103, %p104
      %p106 = scmp.ne.s32.totalorder %s95, %s98
      %p107 = scmp.eq.s32.totalorder %s26, 1
      %p108 = por %p106, %p107
      %p109 = scmp.ne.s32.totalorder %s98, %s99
      %p110 = scmp.eq.s32.totalorder %s26, 0
      %p111 = por %p109, %p110
      %p112 = scmp.ne.s32.totalorder %s98, %s99
      %p113 = scmp.eq.s32.totalorder %s27, 1
      %p114 = por %p112, %p113
      %p116 = scmp.ne.s32.totalorder %s99, %s115
      %p117 = scmp.eq.s32.totalorder %s27, 0
      %p118 = por %p116, %p117
      %s119 = ssub.s32 %s29, %s36
      %p120 = scmp.eq.s32.totalorder %s119, 0
      %s122 = sadd.s32 %s121, 1
      %s123 = scalar_select %p120, %s121, %s122
      %p126 = pneg %p120
      %p127 = scmp.eq.s32.totalorder %s21, 1
      %p128 = por %p126, %p127
      %p129 = scmp.ne.s32.totalorder %s121, %s124
      %p130 = scmp.eq.s32.totalorder %s21, 0
      %p131 = por %p129, %p130
      %p132 = scmp.ne.s32.totalorder %s121, %s124
      %p133 = scmp.eq.s32.totalorder %s26, 1
      %p134 = por %p132, %p133
      %p135 = scmp.ne.s32.totalorder %s124, %s125
      %p136 = scmp.eq.s32.totalorder %s26, 0
      %p137 = por %p135, %p136
      %p138 = scmp.ne.s32.totalorder %s124, %s125
      %p139 = scmp.eq.s32.totalorder %s27, 1
      %p140 = por %p138, %p139
      %p142 = scmp.ne.s32.totalorder %s125, %s141
      %p143 = scmp.eq.s32.totalorder %s27, 0
      %p144 = por %p142, %p143
      %s145 = ssub.s32 %s29, %s36
      %p146 = scmp.eq.s32.totalorder %s145, 0
      %s148 = sadd.s32 %s147, 1
      %s149 = scalar_select %p146, %s147, %s148
      %p152 = pneg %p146
      %p153 = scmp.eq.s32.totalorder %s21, 1
      %p154 = por %p152, %p153
      %p155 = scmp.ne.s32.totalorder %s147, %s150
      %p156 = scmp.eq.s32.totalorder %s21, 0
      %p157 = por %p155, %p156
      %p158 = scmp.ne.s32.totalorder %s147, %s150
      %p159 = scmp.eq.s32.totalorder %s26, 1
      %p160 = por %p158, %p159
      %p161 = scmp.ne.s32.totalorder %s150, %s151
      %p162 = scmp.eq.s32.totalorder %s26, 0
      %p163 = por %p161, %p162
      %p164 = scmp.ne.s32.totalorder %s150, %s151
      %p165 = scmp.eq.s32.totalorder %s27, 1
      %p166 = por %p164, %p165
      %p168 = scmp.ne.s32.totalorder %s151, %s167
      %p169 = scmp.eq.s32.totalorder %s27, 0
      %p170 = por %p168, %p169
      %s171 = ssub.s32 %s29, %s36
      %p172 = scmp.eq.s32.totalorder %s171, 0
      %s174 = sadd.s32 %s173, 1
      %s175 = scalar_select %p172, %s173, %s174
      %p178 = pneg %p172
      %p179 = scmp.eq.s32.totalorder %s21, 1
      %p180 = por %p178, %p179
      %p181 = scmp.ne.s32.totalorder %s173, %s176
      %p182 = scmp.eq.s32.totalorder %s21, 0
      %p183 = por %p181, %p182
      %p184 = scmp.ne.s32.totalorder %s173, %s176
      %p185 = scmp.eq.s32.totalorder %s26, 1
      %p186 = por %p184, %p185
      %p187 = scmp.ne.s32.totalorder %s176, %s177
      %p188 = scmp.eq.s32.totalorder %s26, 0
      %p189 = por %p187, %p188
      %p190 = scmp.ne.s32.totalorder %s176, %s177
      %p191 = scmp.eq.s32.totalorder %s27, 1
      %p192 = por %p190, %p191
      %p194 = scmp.ne.s32.totalorder %s177, %s193
      %p195 = scmp.eq.s32.totalorder %s27, 0
      %p196 = por %p194, %p195
      %s198 = sadd.s32 %s197, 1
      %p201 = scmp.eq.s32.totalorder %s21, 1
      %p202 = scmp.ne.s32.totalorder %s197, %s199
      %p203 = scmp.eq.s32.totalorder %s21, 0
      %p204 = por %p202, %p203
      %p205 = scmp.ne.s32.totalorder %s197, %s199
      %p206 = scmp.eq.s32.totalorder %s26, 1
      %p207 = por %p205, %p206
      %p208 = scmp.ne.s32.totalorder %s199, %s200
      %p209 = scmp.eq.s32.totalorder %s26, 0
      %p210 = por %p208, %p209
      %p211 = scmp.ne.s32.totalorder %s199, %s200
      %p212 = scmp.eq.s32.totalorder %s27, 1
      %p213 = por %p211, %p212
      %p215 = scmp.ne.s32.totalorder %s200, %s214
      %p216 = scmp.eq.s32.totalorder %s27, 0
      %p217 = por %p215, %p216
      %s218 = ssub.s32 %s28, %s40
      %p219 = scmp.eq.s32.totalorder %s218, 0
      %s221 = sadd.s32 %s220, 1
      %s222 = scalar_select %p219, %s220, %s221
      %p225 = pneg %p219
      %p226 = scmp.eq.s32.totalorder %s21, 1
      %p227 = por %p225, %p226
      %p228 = scmp.ne.s32.totalorder %s220, %s223
      %p229 = scmp.eq.s32.totalorder %s21, 0
      %p230 = por %p228, %p229
      %p231 = scmp.ne.s32.totalorder %s220, %s223
      %p232 = scmp.eq.s32.totalorder %s26, 1
      %p233 = por %p231, %p232
      %p234 = scmp.ne.s32.totalorder %s223, %s224
      %p235 = scmp.eq.s32.totalorder %s26, 0
      %p236 = por %p234, %p235
      %p237 = scmp.ne.s32.totalorder %s223, %s224
      %p238 = scmp.eq.s32.totalorder %s27, 1
      %p239 = por %p237, %p238
      %p241 = scmp.ne.s32.totalorder %s224, %s240
      %p242 = scmp.eq.s32.totalorder %s27, 0
      %p243 = por %p241, %p242
      %p244 = scmp.le.s32.totalorder 1, %s21
      %p245 = scmp.lt.s32.totalorder %s21, 3
      %p246 = pnand %p244, %p245
      %p247 = pneg %p246
      // Predicated region
      $region9: #{tpu_custom_call.1} parent=5 // pred_check
        _
      $region10: #{tpu_custom_call.1} parent=5 // pred_check_branch
        %249 = sbr.rel (%p246) target = $region12
      $region11: #{tpu_custom_call.1} parent=5 // pred_region
        %s250 = ssub.s32 %s21, 1
        // Predicated region
        $region13: #{tpu_custom_call.1} parent=11 // pred_check
          %p251 = pneg %p59
        $region14: #{tpu_custom_call.1} parent=11 // pred_check_branch
          %253 = sbr.rel (%p251) target = $region16
        $region15: #{tpu_custom_call.1} parent=11 // pred_region
          %s254 = smul.u32 4, %s30
          %s256 = ssub.s32 512, 512
          %257 = vsyncadd [#allocation4], %s256
          %s258 = smul.addr %s254, 128
          %s259 = scalar_lea.hbm %s0, %s258
          %s260 = sshll.u32 [#allocation3], 4
          %s261 = int_to_ptr.vmem [resolvable:$true] %s260
          %266 = dma.hbm_to_vmem [thread:$0]  %s259, 512, %s261, [#allocation4], 128, 128, 8
        $region16: #{tpu_custom_call.1} parent=11 // pred_fallthru
          _
        // Predicated region
        $region17: #{tpu_custom_call.1} parent=11 // pred_check
          %p267 = pneg %p210
        $region18: #{tpu_custom_call.1} parent=11 // pred_check_branch
          %269 = sbr.rel (%p267) target = $region20
        $region19: #{tpu_custom_call.1} parent=11 // pred_region
          _
        $region20: #{tpu_custom_call.1} parent=11 // pred_fallthru
          _
      $region12: #{tpu_custom_call.1} parent=5 // pred_fallthru
        _
      %p270 = scmp.lt.s32.totalorder %s21, 2
      // Predicated region
      $region21: #{tpu_custom_call.1} parent=5 // pred_check
        %p271 = pneg %p270
      $region22: #{tpu_custom_call.1} parent=5 // pred_check_branch
        %273 = sbr.rel (%p271) target = $region24
      $region23: #{tpu_custom_call.1} parent=5 // pred_region
        // Predicated region
        $region25: #{tpu_custom_call.1} parent=23 // pred_check
          %p274 = pneg %p79
        $region26: #{tpu_custom_call.1} parent=23 // pred_check_branch
          %276 = sbr.rel (%p274) target = $region28
        $region27: #{tpu_custom_call.1} parent=23 // pred_region
          %s277 = sand.u32 %s21, 1
          %s278 = scalar_lea.sflag [#allocation7], %s277
          %s279 = sand.u32 %s69, 1
          %s280 = smul.addr %s279, 128
          %s281 = scalar_lea.vmem [#allocation6], %s280
          %s283 = ssub.s32 2048, 2048
          %284 = vsyncadd %s278, %s283
          %s285 = smul.addr %s29, 128
          %s286 = scalar_lea.hbm %s1, %s285
          %s287 = sshll.u32 %s281, 4
          %s288 = int_to_ptr.vmem [resolvable:$true] %s287
          %293 = dma.hbm_to_vmem [thread:$0]  %s286, 2048, %s288, %s278, 256, 128, 8
        $region28: #{tpu_custom_call.1} parent=23 // pred_fallthru
          _
        // Predicated region
        $region29: #{tpu_custom_call.1} parent=23 // pred_check
          %p294 = pneg %p105
        $region30: #{tpu_custom_call.1} parent=23 // pred_check_branch
          %296 = sbr.rel (%p294) target = $region32
        $region31: #{tpu_custom_call.1} parent=23 // pred_region
          %s297 = sand.u32 %s21, 1
          %s298 = scalar_lea.sflag [#allocation7], %s297
          %s299 = sand.u32 %s95, 1
          %s300 = smul.addr %s299, 128
          %s301 = scalar_lea.vmem [#allocation8], %s300
          %s303 = ssub.s32 2048, 2048
          %304 = vsyncadd %s298, %s303
          %s305 = smul.addr %s29, 128
          %s306 = scalar_lea.hbm %s2, %s305
          %s307 = sshll.u32 %s301, 4
          %s308 = int_to_ptr.vmem [resolvable:$true] %s307
          %313 = dma.hbm_to_vmem [thread:$0]  %s306, 2048, %s308, %s298, 256, 128, 8
        $region32: #{tpu_custom_call.1} parent=23 // pred_fallthru
          _
        // Predicated region
        $region33: #{tpu_custom_call.1} parent=23 // pred_check
          %p314 = pneg %p131
        $region34: #{tpu_custom_call.1} parent=23 // pred_check_branch
          %316 = sbr.rel (%p314) target = $region36
        $region35: #{tpu_custom_call.1} parent=23 // pred_region
          %p317 = scmp.lt.s32.totalorder %s29, 1
          %s318 = scalar_select %p317, %s29, 1
          %s319 = scalar_lea.vmem %s3, %s318
        $region36: #{tpu_custom_call.1} parent=23 // pred_fallthru
          _
        // Predicated region
        $region37: #{tpu_custom_call.1} parent=23 // pred_check
          %p320 = pneg %p157
        $region38: #{tpu_custom_call.1} parent=23 // pred_check_branch
          %322 = sbr.rel (%p320) target = $region40
        $region39: #{tpu_custom_call.1} parent=23 // pred_region
          %p323 = scmp.lt.s32.totalorder %s29, 1
          %s324 = scalar_select %p323, %s29, 1
          %s325 = scalar_lea.vmem %s4, %s324
        $region40: #{tpu_custom_call.1} parent=23 // pred_fallthru
          _
        // Predicated region
        $region41: #{tpu_custom_call.1} parent=23 // pred_check
          %p326 = pneg %p183
        $region42: #{tpu_custom_call.1} parent=23 // pred_check_branch
          %328 = sbr.rel (%p326) target = $region44
        $region43: #{tpu_custom_call.1} parent=23 // pred_region
          %s329 = sand.u32 %s173, 1
          %s330 = scalar_lea.sflag [#allocation10], %s329
          %s331 = sand.u32 %s173, 1
          %s332 = smul.addr %s331, 128
          %s333 = scalar_lea.vmem [#allocation9], %s332
          %s334 = smul.u32 16, %s29
          %s336 = ssub.s32 2048, 2048
          %337 = vsyncadd %s330, %s336
          %s338 = smul.addr %s334, 128
          %s339 = scalar_lea.hbm %s5, %s338
          %s340 = sshll.u32 %s333, 4
          %s341 = int_to_ptr.vmem [resolvable:$true] %s340
          %346 = dma.hbm_to_vmem [thread:$0]  %s339, 2048, %s341, %s330, 128, 128, 8
        $region44: #{tpu_custom_call.1} parent=23 // pred_fallthru
          _
      $region24: #{tpu_custom_call.1} parent=5 // pred_fallthru
        _
      %p347 = scmp.le.s32.totalorder 1, %s21
      %p348 = scmp.lt.s32.totalorder %s21, 3
      %p349 = pnand %p347, %p348
      %p350 = pneg %p349
      // Predicated region
      $region45: #{tpu_custom_call.1} parent=5 // pred_check
        _
      $region46: #{tpu_custom_call.1} parent=5 // pred_check_branch
        %352 = sbr.rel (%p349) target = $region48
      $region47: #{tpu_custom_call.1} parent=5 // pred_region
        %s353 = ssub.s32 %s21, 1
        // Predicated region
        $region49: #{tpu_custom_call.1} parent=47 // pred_check
          %p354 = pneg %p59
        $region50: #{tpu_custom_call.1} parent=47 // pred_check_branch
          %356 = sbr.rel (%p354) target = $region52
        $region51: #{tpu_custom_call.1} parent=47 // pred_region
          %357 = dma.done [#allocation4], 512
        $region52: #{tpu_custom_call.1} parent=47 // pred_fallthru
          _
        %s358 = sand.u32 %s26, 1
        %s359 = scalar_lea.sflag [#allocation7], %s358
        %s360 = sand.u32 %s72, 1
        %s361 = smul.addr %s360, 128
        %s362 = scalar_lea.vmem [#allocation6], %s361
        // Predicated region
        $region53: #{tpu_custom_call.1} parent=47 // pred_check
          %p363 = pneg %p85
        $region54: #{tpu_custom_call.1} parent=47 // pred_check_branch
          %365 = sbr.rel (%p363) target = $region56
        $region55: #{tpu_custom_call.1} parent=47 // pred_region
          %366 = dma.done %s359, 2048
        $region56: #{tpu_custom_call.1} parent=47 // pred_fallthru
          _
        %s367 = sand.u32 %s26, 1
        %s368 = scalar_lea.sflag [#allocation7], %s367
        %s369 = sand.u32 %s98, 1
        %s370 = smul.addr %s369, 128
        %s371 = scalar_lea.vmem [#allocation8], %s370
        // Predicated region
        $region57: #{tpu_custom_call.1} parent=47 // pred_check
          %p372 = pneg %p111
        $region58: #{tpu_custom_call.1} parent=47 // pred_check_branch
          %374 = sbr.rel (%p372) target = $region60
        $region59: #{tpu_custom_call.1} parent=47 // pred_region
          %375 = dma.done %s368, 2048
        $region60: #{tpu_custom_call.1} parent=47 // pred_fallthru
          _
        %s376 = sand.u32 %s176, 1
        %s377 = scalar_lea.sflag [#allocation10], %s376
        %s378 = sand.u32 %s176, 1
        %s379 = smul.addr %s378, 128
        %s380 = scalar_lea.vmem [#allocation9], %s379
        // Predicated region
        $region61: #{tpu_custom_call.1} parent=47 // pred_check
          %p381 = pneg %p189
        $region62: #{tpu_custom_call.1} parent=47 // pred_check_branch
          %383 = sbr.rel (%p381) target = $region64
        $region63: #{tpu_custom_call.1} parent=47 // pred_region
          %384 = dma.done %s377, 2048
        $region64: #{tpu_custom_call.1} parent=47 // pred_fallthru
          _
        %p385 = pneg %p59
        %p386 = pneg %p56
        %s387 = sand.u32 %s26, 1
        %s388 = scalar_lea.sflag [#allocation7], %s387
        %s389 = sand.u32 %s72, 1
        %s390 = smul.addr %s389, 128
        %s391 = scalar_lea.vmem [#allocation6], %s390
        %p392 = pneg %p85
        %p393 = pneg %p82
        %s394 = sand.u32 %s26, 1
        %s395 = scalar_lea.sflag [#allocation7], %s394
        %s396 = sand.u32 %s98, 1
        %s397 = smul.addr %s396, 128
        %s398 = scalar_lea.vmem [#allocation8], %s397
        %p399 = pneg %p111
        %p400 = pneg %p108
        %p401 = scmp.lt.s32.totalorder %s31, 1
        %s402 = scalar_select %p401, %s31, 1
        %s403 = scalar_lea.vmem %s3, %s402
        %p404 = pneg %p137
        %p405 = pneg %p134
        %p406 = scmp.lt.s32.totalorder %s31, 1
        %s407 = scalar_select %p406, %s31, 1
        %s408 = scalar_lea.vmem %s4, %s407
        %p409 = pneg %p163
        %p410 = pneg %p160
        %s411 = sand.u32 %s176, 1
        %s412 = scalar_lea.sflag [#allocation10], %s411
        %s413 = sand.u32 %s176, 1
        %s414 = smul.addr %s413, 128
        %s415 = scalar_lea.vmem [#allocation9], %s414
        %p416 = pneg %p189
        %p417 = pneg %p186
        %p418 = pneg %p210
        %p419 = pneg %p207
        %p420 = pneg %p236
        %p421 = pneg %p233
        %s422 = smul.u32 4, %s30
        %p423 = scmp.lt.s32.totalorder %s31, 1
        %s424 = scalar_select %p423, %s31, 1
        %s425 = scalar_lea.vmem %s3, %s424
        %p426 = scmp.lt.s32.totalorder %s31, 1
        %s427 = scalar_select %p426, %s31, 1
        %s428 = scalar_lea.vmem %s4, %s427
        %s429 = smul.u32 16, %s31
        %s430 = smul.u32 4, %s30
        %p431 = scmp.eq.s32.totalorder %s31, 0
        // Predicated region
        $region65: #{tpu_custom_call.1} parent=47 // pred_check
          %p432 = pneg %p431
        $region66: #{tpu_custom_call.1} parent=47 // pred_check_branch
          %434 = sbr.rel (%p432) target = $region68
        $region67: #{tpu_custom_call.1} parent=47 // pred_region
          %435 = vst [vmem:[#allocation2] sm:$0xff] 0.0
          %436 = vst [vmem:[#allocation2 + $0x8] sm:$0xff] 0.0
          %437 = vst [vmem:[#allocation2 + $0x10] sm:$0xff] 0.0
          %438 = vst [vmem:[#allocation2 + $0x18] sm:$0xff] 0.0
        $region68: #{tpu_custom_call.1} parent=47 // pred_fallthru
          _
        %v439 = vld [vmem:[#allocation3] sm:$0xff]
        %v440 = vld [vmem:[#allocation3 + $0x8] sm:$0xff]
        %v441 = vld [vmem:[#allocation3 + $0x10] sm:$0xff]
        %v442 = vld [vmem:[#allocation3 + $0x18] sm:$0xff]
        %v443 = vld [vmem:[%s362] sm:$0xff]
        %v444 = vld [vmem:[%s362 + $0x8] sm:$0xff]
        %v445 = vld [vmem:[%s362 + $0x10] sm:$0xff]
        %v446 = vld [vmem:[%s362 + $0x18] sm:$0xff]
        %v447 = vld [vmem:[%s362 + $0x20] sm:$0xff]
        %v448 = vld [vmem:[%s362 + $0x28] sm:$0xff]
        %v449 = vld [vmem:[%s362 + $0x30] sm:$0xff]
        %v450 = vld [vmem:[%s362 + $0x38] sm:$0xff]
        %v451 = vld [vmem:[%s362 + $0x40] sm:$0xff]
        %v452 = vld [vmem:[%s362 + $0x48] sm:$0xff]
        %v453 = vld [vmem:[%s362 + $0x50] sm:$0xff]
        %v454 = vld [vmem:[%s362 + $0x58] sm:$0xff]
        %v455 = vld [vmem:[%s362 + $0x60] sm:$0xff]
        %v456 = vld [vmem:[%s362 + $0x68] sm:$0xff]
        %v457 = vld [vmem:[%s362 + $0x70] sm:$0xff]
        %v458 = vld [vmem:[%s362 + $0x78] sm:$0xff]
        %v459 = vld [vmem:[%s425] sm:$0x1]
        %v461 = vlaneseq
        %v462 = vshrl.u32 %v461, 7
        %v463 = vsub.s32 0, %v462
        %v464 = vrot.slane %v459, %v463
        %466 = vmatprep.subr.mxu0 0.0
        %467 = vmatpush1.msra.mxu0 %v443
        %468 = vmatprep.subr.mxu0 0.0
        %469 = vmatpush1.msra.mxu0 %v444
        %470 = vmatprep.subr.mxu0 0.0
        %471 = vmatpush1.msra.mxu0 %v445
        %472 = vmatprep.subr.mxu0 0.0
        %473 = vmatpush1.msra.mxu0 %v446
        %474 = vmatprep.subr.mxu0 0.0
        %475 = vmatpush1.msra.mxu0 %v447
        %476 = vmatprep.subr.mxu0 0.0
        %477 = vmatpush1.msra.mxu0 %v448
        %478 = vmatprep.subr.mxu0 0.0
        %479 = vmatpush1.msra.mxu0 %v449
        %480 = vmatprep.subr.mxu0 0.0
        %481 = vmatpush1.msra.mxu0 %v450
        %482 = vmatprep.subr.mxu0 0.0
        %483 = vmatpush1.msra.mxu0 %v451
        %484 = vmatprep.subr.mxu0 0.0
        %485 = vmatpush1.msra.mxu0 %v452
        %486 = vmatprep.subr.mxu0 0.0
        %487 = vmatpush1.msra.mxu0 %v453
        %488 = vmatprep.subr.mxu0 0.0
        %489 = vmatpush1.msra.mxu0 %v454
        %490 = vmatprep.subr.mxu0 0.0
        %491 = vmatpush1.msra.mxu0 %v455
        %492 = vmatprep.subr.mxu0 0.0
        %493 = vmatpush1.msra.mxu0 %v456
        %494 = vmatprep.subr.mxu0 0.0
        %495 = vmatpush1.msra.mxu0 %v457
        %496 = vmatprep.subr.mxu0 0.0
        %497 = vmatpush1.msra.mxu0 %v458
        %498 = vmatprep.subr.mxu0 0.0
        %499 = vmatpush1.msra.mxu0 0.0
        %500 = vmatprep.subr.mxu0 0.0
        %501 = vmatpush1.msra.mxu0 0.0
        %502 = vmatprep.subr.mxu0 0.0
        %503 = vmatpush1.msra.mxu0 0.0
        %504 = vmatprep.subr.mxu0 0.0
        %505 = vmatpush1.msra.mxu0 0.0
        %506 = vmatprep.subr.mxu0 0.0
        %507 = vmatpush1.msra.mxu0 0.0
        %508 = vmatprep.subr.mxu0 0.0
        %509 = vmatpush1.msra.mxu0 0.0
        %510 = vmatprep.subr.mxu0 0.0
        %511 = vmatpush1.msra.mxu0 0.0
        %512 = vmatprep.subr.mxu0 0.0
        %513 = vmatpush1.msra.mxu0 0.0
        %514 = vmatprep.subr.mxu0 0.0
        %515 = vmatpush1.msra.mxu0 0.0
        %516 = vmatprep.subr.mxu0 0.0
        %517 = vmatpush1.msra.mxu0 0.0
        %518 = vmatprep.subr.mxu0 0.0
        %519 = vmatpush1.msra.mxu0 0.0
        %520 = vmatprep.subr.mxu0 0.0
        %521 = vmatpush1.msra.mxu0 0.0
        %522 = vmatprep.subr.mxu0 0.0
        %523 = vmatpush1.msra.mxu0 0.0
        %524 = vmatprep.subr.mxu0 0.0
        %525 = vmatpush1.msra.mxu0 0.0
        %526 = vmatprep.subr.mxu0 0.0
        %527 = vmatpush1.msra.mxu0 0.0
        %528 = vmatprep.subr.mxu0 0.0
        %529 = vmatpush1.msra.mxu0 0.0
        %530 = vmatprep.mubr.f32.mxu0 0.0
        %531 = vmatmul.mubr.f32.gmra.mrb[0].mxu0 %v439
        %v532 = vpop.f32.mrb[0].mxu0
        %v533 = vadd.f32 %v464, %v532
        %v534 = vpop.f32.mrb[0].mxu0
        %535 = vmatprep.mubr.f32.mxu0 0.0
        %536 = vmatmul.mubr.f32.gmra.mrb[0].mxu0 %v440
        %v537 = vpop.f32.mrb[0].mxu0
        %v538 = vadd.f32 %v464, %v537
        %v539 = vpop.f32.mrb[0].mxu0
        %540 = vmatprep.mubr.f32.mxu0 0.0
        %541 = vmatmul.mubr.f32.gmra.mrb[0].mxu0 %v441
        %v542 = vpop.f32.mrb[0].mxu0
        %v543 = vadd.f32 %v464, %v542
        %v544 = vpop.f32.mrb[0].mxu0
        %545 = vmatprep.mubr.f32.mxu0 0.0
        %546 = vmatmul.mubr.f32.gmra.mrb[0].mxu0 %v442
        %v547 = vpop.f32.mrb[0].mxu0
        %v548 = vadd.f32 %v464, %v547
        %v549 = vpop.f32.mrb[0].mxu0
        %550 = vdwg.mxu0
        %v551 = vld [vmem:[%s371] sm:$0xff]
        %v552 = vld [vmem:[%s371 + $0x8] sm:$0xff]
        %v553 = vld [vmem:[%s371 + $0x10] sm:$0xff]
        %v554 = vld [vmem:[%s371 + $0x18] sm:$0xff]
        %v555 = vld [vmem:[%s371 + $0x20] sm:$0xff]
        %v556 = vld [vmem:[%s371 + $0x28] sm:$0xff]
        %v557 = vld [vmem:[%s371 + $0x30] sm:$0xff]
        %v558 = vld [vmem:[%s371 + $0x38] sm:$0xff]
        %v559 = vld [vmem:[%s371 + $0x40] sm:$0xff]
        %v560 = vld [vmem:[%s371 + $0x48] sm:$0xff]
        %v561 = vld [vmem:[%s371 + $0x50] sm:$0xff]
        %v562 = vld [vmem:[%s371 + $0x58] sm:$0xff]
        %v563 = vld [vmem:[%s371 + $0x60] sm:$0xff]
        %v564 = vld [vmem:[%s371 + $0x68] sm:$0xff]
        %v565 = vld [vmem:[%s371 + $0x70] sm:$0xff]
        %v566 = vld [vmem:[%s371 + $0x78] sm:$0xff]
        %v567 = vld [vmem:[%s428] sm:$0x1]
        %v569 = vlaneseq
        %v570 = vshrl.u32 %v569, 7
        %v571 = vsub.s32 0, %v570
        %v572 = vrot.slane %v567, %v571
        %574 = vmatprep.subr.mxu0 0.0
        %575 = vmatpush1.msra.mxu0 %v551
        %576 = vmatprep.subr.mxu0 0.0
        %577 = vmatpush1.msra.mxu0 %v552
        %578 = vmatprep.subr.mxu0 0.0
        %579 = vmatpush1.msra.mxu0 %v553
        %580 = vmatprep.subr.mxu0 0.0
        %581 = vmatpush1.msra.mxu0 %v554
        %582 = vmatprep.subr.mxu0 0.0
        %583 = vmatpush1.msra.mxu0 %v555
        %584 = vmatprep.subr.mxu0 0.0
        %585 = vmatpush1.msra.mxu0 %v556
        %586 = vmatprep.subr.mxu0 0.0
        %587 = vmatpush1.msra.mxu0 %v557
        %588 = vmatprep.subr.mxu0 0.0
        %589 = vmatpush1.msra.mxu0 %v558
        %590 = vmatprep.subr.mxu0 0.0
        %591 = vmatpush1.msra.mxu0 %v559
        %592 = vmatprep.subr.mxu0 0.0
        %593 = vmatpush1.msra.mxu0 %v560
        %594 = vmatprep.subr.mxu0 0.0
        %595 = vmatpush1.msra.mxu0 %v561
        %596 = vmatprep.subr.mxu0 0.0
        %597 = vmatpush1.msra.mxu0 %v562
        %598 = vmatprep.subr.mxu0 0.0
        %599 = vmatpush1.msra.mxu0 %v563
        %600 = vmatprep.subr.mxu0 0.0
        %601 = vmatpush1.msra.mxu0 %v564
        %602 = vmatprep.subr.mxu0 0.0
        %603 = vmatpush1.msra.mxu0 %v565
        %604 = vmatprep.subr.mxu0 0.0
        %605 = vmatpush1.msra.mxu0 %v566
        %606 = vmatprep.subr.mxu0 0.0
        %607 = vmatpush1.msra.mxu0 0.0
        %608 = vmatprep.subr.mxu0 0.0
        %609 = vmatpush1.msra.mxu0 0.0
        %610 = vmatprep.subr.mxu0 0.0
        %611 = vmatpush1.msra.mxu0 0.0
        %612 = vmatprep.subr.mxu0 0.0
        %613 = vmatpush1.msra.mxu0 0.0
        %614 = vmatprep.subr.mxu0 0.0
        %615 = vmatpush1.msra.mxu0 0.0
        %616 = vmatprep.subr.mxu0 0.0
        %617 = vmatpush1.msra.mxu0 0.0
        %618 = vmatprep.subr.mxu0 0.0
        %619 = vmatpush1.msra.mxu0 0.0
        %620 = vmatprep.subr.mxu0 0.0
        %621 = vmatpush1.msra.mxu0 0.0
        %622 = vmatprep.subr.mxu0 0.0
        %623 = vmatpush1.msra.mxu0 0.0
        %624 = vmatprep.subr.mxu0 0.0
        %625 = vmatpush1.msra.mxu0 0.0
        %626 = vmatprep.subr.mxu0 0.0
        %627 = vmatpush1.msra.mxu0 0.0
        %628 = vmatprep.subr.mxu0 0.0
        %629 = vmatpush1.msra.mxu0 0.0
        %630 = vmatprep.subr.mxu0 0.0
        %631 = vmatpush1.msra.mxu0 0.0
        %632 = vmatprep.subr.mxu0 0.0
        %633 = vmatpush1.msra.mxu0 0.0
        %634 = vmatprep.subr.mxu0 0.0
        %635 = vmatpush1.msra.mxu0 0.0
        %636 = vmatprep.subr.mxu0 0.0
        %637 = vmatpush1.msra.mxu0 0.0
        %638 = vmatprep.mubr.f32.mxu0 0.0
        %639 = vmatmul.mubr.f32.gmra.mrb[0].mxu0 %v439
        %v640 = vpop.f32.mrb[0].mxu0
        %v641 = vadd.f32 %v572, %v640
        %v642 = vpop.f32.mrb[0].mxu0
        %643 = vmatprep.mubr.f32.mxu0 0.0
        %644 = vmatmul.mubr.f32.gmra.mrb[0].mxu0 %v440
        %v645 = vpop.f32.mrb[0].mxu0
        %v646 = vadd.f32 %v572, %v645
        %v647 = vpop.f32.mrb[0].mxu0
        %648 = vmatprep.mubr.f32.mxu0 0.0
        %649 = vmatmul.mubr.f32.gmra.mrb[0].mxu0 %v441
        %v650 = vpop.f32.mrb[0].mxu0
        %v651 = vadd.f32 %v572, %v650
        %v652 = vpop.f32.mrb[0].mxu0
        %653 = vmatprep.mubr.f32.mxu0 0.0
        %654 = vmatmul.mubr.f32.gmra.mrb[0].mxu0 %v442
        %v655 = vpop.f32.mrb[0].mxu0
        %v656 = vadd.f32 %v572, %v655
        %v657 = vpop.f32.mrb[0].mxu0
        %658 = vdwg.mxu0
        %v659 = vmul.f32 %v533, 0.5
        %v660 = vmul.f32 %v538, 0.5
        %v661 = vmul.f32 %v543, 0.5
        %v662 = vmul.f32 %v548, 0.5
        %v663 = vmul.f32 %v533, 0.044715
        %v664 = vmul.f32 %v538, 0.044715
        %v665 = vmul.f32 %v543, 0.044715
        %v666 = vmul.f32 %v548, 0.044715
        %v667 = vmul.f32 %v663, %v533
        %v668 = vmul.f32 %v664, %v538
        %v669 = vmul.f32 %v665, %v543
        %v670 = vmul.f32 %v666, %v548
        %v671 = vmul.f32 %v667, %v533
        %v672 = vmul.f32 %v668, %v538
        %v673 = vmul.f32 %v669, %v543
        %v674 = vmul.f32 %v670, %v548
        %v675 = vadd.f32 %v533, %v671
        %v676 = vadd.f32 %v538, %v672
        %v677 = vadd.f32 %v543, %v673
        %v678 = vadd.f32 %v548, %v674
        %v679 = vmul.f32 %v675, 0.7978846
        %v680 = vmul.f32 %v676, 0.7978846
        %v681 = vmul.f32 %v677, 0.7978846
        %v682 = vmul.f32 %v678, 0.7978846
        %v683 = vtanh.pop %v679
        %v684 = vtanh.pop %v680
        %v685 = vtanh.pop %v681
        %v686 = vtanh.pop %v682
        %v687 = vadd.f32 %v683, 1.0
        %v688 = vadd.f32 %v684, 1.0
        %v689 = vadd.f32 %v685, 1.0
        %v690 = vadd.f32 %v686, 1.0
        %v691 = vmul.f32 %v659, %v687
        %v692 = vmul.f32 %v660, %v688
        %v693 = vmul.f32 %v661, %v689
        %v694 = vmul.f32 %v662, %v690
        %v695 = vmul.f32 %v691, %v641
        %v696 = vmul.f32 %v692, %v646
        %v697 = vmul.f32 %v693, %v651
        %v698 = vmul.f32 %v694, %v656
        %v699 = vld [vmem:[#allocation2] sm:$0xff]
        %v700 = vld [vmem:[#allocation2 + $0x8] sm:$0xff]
        %v701 = vld [vmem:[#allocation2 + $0x10] sm:$0xff]
        %v702 = vld [vmem:[#allocation2 + $0x18] sm:$0xff]
        %v703 = vld [vmem:[%s380] sm:$0xff]
        %v704 = vld [vmem:[%s380 + $0x8] sm:$0xff]
        %v705 = vld [vmem:[%s380 + $0x10] sm:$0xff]
        %v706 = vld [vmem:[%s380 + $0x18] sm:$0xff]
        %v707 = vld [vmem:[%s380 + $0x20] sm:$0xff]
        %v708 = vld [vmem:[%s380 + $0x28] sm:$0xff]
        %v709 = vld [vmem:[%s380 + $0x30] sm:$0xff]
        %v710 = vld [vmem:[%s380 + $0x38] sm:$0xff]
        %v711 = vld [vmem:[%s380 + $0x40] sm:$0xff]
        %v712 = vld [vmem:[%s380 + $0x48] sm:$0xff]
        %v713 = vld [vmem:[%s380 + $0x50] sm:$0xff]
        %v714 = vld [vmem:[%s380 + $0x58] sm:$0xff]
        %v715 = vld [vmem:[%s380 + $0x60] sm:$0xff]
        %v716 = vld [vmem:[%s380 + $0x68] sm:$0xff]
        %v717 = vld [vmem:[%s380 + $0x70] sm:$0xff]
        %v718 = vld [vmem:[%s380 + $0x78] sm:$0xff]
        %719 = vmatprep.subr.mxu0 0.0
        %720 = vmatpush1.msra.mxu0 %v703
        %721 = vmatprep.subr.mxu0 0.0
        %722 = vmatpush1.msra.mxu0 %v704
        %723 = vmatprep.subr.mxu0 0.0
        %724 = vmatpush1.msra.mxu0 %v705
        %725 = vmatprep.subr.mxu0 0.0
        %726 = vmatpush1.msra.mxu0 %v706
        %727 = vmatprep.subr.mxu0 0.0
        %728 = vmatpush1.msra.mxu0 %v707
        %729 = vmatprep.subr.mxu0 0.0
        %730 = vmatpush1.msra.mxu0 %v708
        %731 = vmatprep.subr.mxu0 0.0
        %732 = vmatpush1.msra.mxu0 %v709
        %733 = vmatprep.subr.mxu0 0.0
        %734 = vmatpush1.msra.mxu0 %v710
        %735 = vmatprep.subr.mxu0 0.0
        %736 = vmatpush1.msra.mxu0 %v711
        %737 = vmatprep.subr.mxu0 0.0
        %738 = vmatpush1.msra.mxu0 %v712
        %739 = vmatprep.subr.mxu0 0.0
        %740 = vmatpush1.msra.mxu0 %v713
        %741 = vmatprep.subr.mxu0 0.0
        %742 = vmatpush1.msra.mxu0 %v714
        %743 = vmatprep.subr.mxu0 0.0
        %744 = vmatpush1.msra.mxu0 %v715
        %745 = vmatprep.subr.mxu0 0.0
        %746 = vmatpush1.msra.mxu0 %v716
        %747 = vmatprep.subr.mxu0 0.0
        %748 = vmatpush1.msra.mxu0 %v717
        %749 = vmatprep.subr.mxu0 0.0
        %750 = vmatpush1.msra.mxu0 %v718
        %751 = vmatprep.subr.mxu0 0.0
        %752 = vmatpush1.msra.mxu0 0.0
        %753 = vmatprep.subr.mxu0 0.0
        %754 = vmatpush1.msra.mxu0 0.0
        %755 = vmatprep.subr.mxu0 0.0
        %756 = vmatpush1.msra.mxu0 0.0
        %757 = vmatprep.subr.mxu0 0.0
        %758 = vmatpush1.msra.mxu0 0.0
        %759 = vmatprep.subr.mxu0 0.0
        %760 = vmatpush1.msra.mxu0 0.0
        %761 = vmatprep.subr.mxu0 0.0
        %762 = vmatpush1.msra.mxu0 0.0
        %763 = vmatprep.subr.mxu0 0.0
        %764 = vmatpush1.msra.mxu0 0.0
        %765 = vmatprep.subr.mxu0 0.0
        %766 = vmatpush1.msra.mxu0 0.0
        %767 = vmatprep.subr.mxu0 0.0
        %768 = vmatpush1.msra.mxu0 0.0
        %769 = vmatprep.subr.mxu0 0.0
        %770 = vmatpush1.msra.mxu0 0.0
        %771 = vmatprep.subr.mxu0 0.0
        %772 = vmatpush1.msra.mxu0 0.0
        %773 = vmatprep.subr.mxu0 0.0
        %774 = vmatpush1.msra.mxu0 0.0
        %775 = vmatprep.subr.mxu0 0.0
        %776 = vmatpush1.msra.mxu0 0.0
        %777 = vmatprep.subr.mxu0 0.0
        %778 = vmatpush1.msra.mxu0 0.0
        %779 = vmatprep.subr.mxu0 0.0
        %780 = vmatpush1.msra.mxu0 0.0
        %781 = vmatprep.subr.mxu0 0.0
        %782 = vmatpush1.msra.mxu0 0.0
        %783 = vmatprep.mubr.f32.mxu0 0.0
        %784 = vmatmul.mubr.f32.gmra.mrb[0].mxu0 %v695
        %v785 = vpop.f32.mrb[0].mxu0
        %v786 = vadd.f32 0.0, %v785
        %v787 = vpop.f32.mrb[0].mxu0
        %788 = vmatprep.mubr.f32.mxu0 0.0
        %789 = vmatmul.mubr.f32.gmra.mrb[0].mxu0 %v696
        %v790 = vpop.f32.mrb[0].mxu0
        %v791 = vadd.f32 0.0, %v790
        %v792 = vpop.f32.mrb[0].mxu0
        %793 = vmatprep.mubr.f32.mxu0 0.0
        %794 = vmatmul.mubr.f32.gmra.mrb[0].mxu0 %v697
        %v795 = vpop.f32.mrb[0].mxu0
        %v796 = vadd.f32 0.0, %v795
        %v797 = vpop.f32.mrb[0].mxu0
        %798 = vmatprep.mubr.f32.mxu0 0.0
        %799 = vmatmul.mubr.f32.gmra.mrb[0].mxu0 %v698
        %v800 = vpop.f32.mrb[0].mxu0
        %v801 = vadd.f32 0.0, %v800
        %v802 = vpop.f32.mrb[0].mxu0
        %803 = vdwg.mxu0
        %v804 = vadd.f32 %v699, %v786
        %v805 = vadd.f32 %v700, %v791
        %v806 = vadd.f32 %v701, %v796
        %v807 = vadd.f32 %v702, %v801
        %808 = vst [vmem:[#allocation2] sm:$0xff] %v804
        %809 = vst [vmem:[#allocation2 + $0x8] sm:$0xff] %v805
        %810 = vst [vmem:[#allocation2 + $0x10] sm:$0xff] %v806
        %811 = vst [vmem:[#allocation2 + $0x18] sm:$0xff] %v807
        %p812 = scmp.eq.s32.totalorder %s31, 1
        // Predicated region
        $region69: #{tpu_custom_call.1} parent=47 // pred_check
          %p813 = pneg %p812
        $region70: #{tpu_custom_call.1} parent=47 // pred_check_branch
          %815 = sbr.rel (%p813) target = $region72
        $region71: #{tpu_custom_call.1} parent=47 // pred_region
          %v816 = vld [vmem:[#allocation2] sm:$0xff]
          %v817 = vld [vmem:[#allocation2 + $0x8] sm:$0xff]
          %v818 = vld [vmem:[#allocation2 + $0x10] sm:$0xff]
          %v819 = vld [vmem:[#allocation2 + $0x18] sm:$0xff]
          %v820 = vld [vmem:[%s6] sm:$0x1]
          %v822 = vlaneseq
          %v823 = vshrl.u32 %v822, 7
          %v824 = vsub.s32 0, %v823
          %v825 = vrot.slane %v820, %v824
          %v827 = vadd.f32 %v816, %v825
          %v828 = vadd.f32 %v817, %v825
          %v829 = vadd.f32 %v818, %v825
          %v830 = vadd.f32 %v819, %v825
          %831 = vst [vmem:[#allocation11] sm:$0xff] %v827
          %832 = vst [vmem:[#allocation11 + $0x8] sm:$0xff] %v828
          %833 = vst [vmem:[#allocation11 + $0x10] sm:$0xff] %v829
          %834 = vst [vmem:[#allocation11 + $0x18] sm:$0xff] %v830
        $region72: #{tpu_custom_call.1} parent=47 // pred_fallthru
          _
        // Predicated region
        $region73: #{tpu_custom_call.1} parent=47 // pred_check
          %p835 = pneg %p233
        $region74: #{tpu_custom_call.1} parent=47 // pred_check_branch
          %837 = sbr.rel (%p835) target = $region76
        $region75: #{tpu_custom_call.1} parent=47 // pred_region
          %s838 = smul.u32 4, %s30
          %s840 = ssub.s32 512, 512
          %841 = vsyncadd [#allocation5], %s840
          %s842 = smul.addr %s838, 128
          %s843 = scalar_lea.hbm %s7, %s842
          %s844 = sshll.u32 [#allocation11], 4
          %s845 = int_to_ptr.vmem [resolvable:$true] %s844
          %850 = dma.vmem_to_hbm [thread:$0]  %s845, 512, %s843, [#allocation5], 128, 128, 8
        $region76: #{tpu_custom_call.1} parent=47 // pred_fallthru
          _
        // Predicated region
        $region77: #{tpu_custom_call.1} parent=47 // pred_check
          %p851 = pneg %p233
        $region78: #{tpu_custom_call.1} parent=47 // pred_check_branch
          %853 = sbr.rel (%p851) target = $region80
        $region79: #{tpu_custom_call.1} parent=47 // pred_region
          %854 = dma.done [#allocation5], 512
        $region80: #{tpu_custom_call.1} parent=47 // pred_fallthru
          _
      $region48: #{tpu_custom_call.1} parent=5 // pred_fallthru
        _
      %p855 = scmp.le.s32.totalorder 2, %s21
      // Predicated region
      $region81: #{tpu_custom_call.1} parent=5 // pred_check
        %p856 = pneg %p855
      $region82: #{tpu_custom_call.1} parent=5 // pred_check_branch
        %858 = sbr.rel (%p856) target = $region84
      $region83: #{tpu_custom_call.1} parent=5 // pred_region
        %s859 = ssub.s32 %s21, 2
      $region84: #{tpu_custom_call.1} parent=5 // pred_fallthru
        _
    $region6: #{tpu_custom_call.1} parent=1 // loop_footer
      %s25 = sadd.s32 1, %s21
    $region7: #{tpu_custom_call.1} parent=1 // loop_footer_branch
      %20 = sbr.rel target = $region3
    $region8: #{tpu_custom_call.1} parent=1 // loop_exit
      _
    %860 = vsyncpa [#allocation4], 1
    %s861 = scalar_lea.sflag [#allocation4], 1
    %862 = vsyncpa %s861, 1
    %863 = vsyncpa [#allocation7], 1
    %s864 = scalar_lea.sflag [#allocation7], 1
    %865 = vsyncpa %s864, 1
    %866 = vsyncpa [#allocation10], 1
    %s867 = scalar_lea.sflag [#allocation10], 1
    %868 = vsyncpa %s867, 1
    %869 = vsyncpa [#allocation5], 1
    %s870 = scalar_lea.sflag [#allocation5], 1
    %871 = vsyncpa %s870, 1

</llo_original>
